<compile_context>
chip_gen: v6e
topology: v6e:2x2x1
jax: 0.10.0
libtpu: 0.0.40
codegen_flags: <defaults>
</compile_context>

<pallas_src>
import jax
import jax.numpy as jnp
from jax.experimental import pallas as pl
from jax.experimental.pallas import tpu as pltpu

_LANE = 128
_SUBLANE = 8
# ~2 MiB per tile -> 2 specs x 2 pipeline buffers ~= 8 MiB resident (v7x safe).
_TARGET_TILE_BYTES = 2 * 1024 * 1024


def _identity_copy_kernel(x_ref, o_ref):
    # Pure pass-through: full-tile VMEM load + store.
    o_ref[...] = x_ref[...]


def _choose_lane_width(n: int) -> int:
    """Largest lane-dense (multiple-of-128) width dividing n, preferring >=8 rows.

    Falls back to 512 (with wrapper-side padding) if n is not a 128-multiple.
    """
    best = None
    for cand in (4096, 2048, 1024, 512, 256, 128):
        if n % cand == 0:
            if best is None:
                best = cand
            if n // cand >= _SUBLANE:
                return cand
    return best if best is not None else 512


def pass_layer(x: jax.Array) -> jax.Array:
    """Identity forward pass of PassLayer, computed through a Pallas kernel."""
    orig_shape = x.shape
    flat = x.reshape(-1)
    n = int(flat.shape[0])
    if n == 0:
        return x

    itemsize = jnp.dtype(x.dtype).itemsize
    lanes = _choose_lane_width(n)
    padded_n = -(-n // lanes) * lanes
    if padded_n != n:
        # Pad the tail so the lane dim is dense; sliced off after the kernel.
        flat = jnp.pad(flat, (0, padded_n - n))
    rows = padded_n // lanes

    # Rows per tile: ~2 MiB tiles; must be a multiple of 8 sublanes unless the
    # block covers the whole row extent.
    tr = max(1, _TARGET_TILE_BYTES // (lanes * itemsize))
    if tr >= rows:
        tr = rows
    else:
        tr = max(_SUBLANE, (tr // _SUBLANE) * _SUBLANE)
    num_tiles = -(-rows // tr)  # cdiv; ragged edge handled by Pallas

    x2 = flat.reshape(rows, lanes)

    out2 = pl.pallas_call(
        _identity_copy_kernel,
        out_shape=jax.ShapeDtypeStruct((rows, lanes), x.dtype),
        grid=(num_tiles,),
        in_specs=[pl.BlockSpec((tr, lanes), lambda i: (i, 0))],
        out_specs=pl.BlockSpec((tr, lanes), lambda i: (i, 0)),
        # Output aliases the input buffer: identity becomes an (at worst)
        # in-place copy; with jit donation at the caller it is a pure alias.
        input_output_aliases={0: 0},
        compiler_params=pltpu.CompilerParams(
            dimension_semantics=("parallel",),
        ),
        cost_estimate=pl.CostEstimate(
            flops=0,
            transcendentals=0,
            bytes_accessed=2 * padded_n * itemsize,
        ),
    )(x2)

    flat_out = out2.reshape(-1)
    if padded_n != n:
        flat_out = flat_out[:n]
    return flat_out.reshape(orig_shape)


if __name__ == "__main__":
    key = jax.random.PRNGKey(0)
    # Small NCHW-style input consistent with a conv-style module:
    # batch=2, channels=4, spatial 16x16.
    x = jax.random.normal(key, (2, 4, 16, 16), dtype=jnp.float32)

    y = pass_layer(x)
    jax.block_until_ready(y)

    assert y.shape == x.shape
    assert y.dtype == x.dtype
    assert bool(jnp.all(y == x))

    print("KERNEL_OK")
</pallas_src>

<mosaic_0001>
module attributes {stable_mosaic.version = 11 : i64} {
  func.func @_identity_copy_kernel(%arg0: i32, %arg1: memref<8x256xf32, #tpu.memory_space<vmem>>, %arg2: memref<8x256xf32, #tpu.memory_space<vmem>>) attributes {dimension_semantics = [#tpu.dimension_semantics<parallel>], iteration_bounds = array<i64: 1>, scalar_prefetch = 0 : i64, scratch_operands = 0 : i64, tpu.core_type = #tpu.core_type<tc>, window_params = [{transform_indices = @transform_0, window_bounds = array<i64: 8, 256>}, {transform_indices = @transform_1, window_bounds = array<i64: 8, 256>}]} {
    %c0 = arith.constant 0 : index
    %c0_0 = arith.constant 0 : index
    %0 = vector.load %arg1[%c0, %c0_0] : memref<8x256xf32, #tpu.memory_space<vmem>>, vector<8x256xf32>
    %c0_1 = arith.constant 0 : index
    %c0_2 = arith.constant 0 : index
    %1 = vector.load %arg2[%c0_1, %c0_2] : memref<8x256xf32, #tpu.memory_space<vmem>>, vector<8x256xf32>
    tpu.vector_store %arg2[%c0_1, %c0_2], %0 {strides = array<i32>} : memref<8x256xf32, #tpu.memory_space<vmem>>, vector<8x256xf32>,
    return
  }
  func.func @transform_0(%arg0: i32) -> (i32, i32) {
    %c0_i32 = arith.constant 0 : i32
    %c0_i32_0 = arith.constant 0 : i32
    return %arg0, %c0_i32 : i32, i32
  }
  func.func @transform_1(%arg0: i32) -> (i32, i32) {
    %c0_i32 = arith.constant 0 : i32
    %c0_i32_0 = arith.constant 0 : i32
    return %arg0, %c0_i32 : i32, i32
  }
}

</mosaic_0001>

<llo_original>
// kernel: tpu_custom_call.1
$region0: #{tpu_custom_call.1}
  #allocation0 [shape = 'u32[]', space=smem, size = 0x4, offset = 0x4, fixed_abs, tag = 'smem constant byte address 0x4 - core index']
  #allocation1 [shape = 'u32[144,128]{1,0:T(1,128)}', space=vmem, size = 0x12000, scoped, tag = 'internal scratch']
  %s0 = inlined_call_operand.hbm [shape: f32[8,256], index: 0, kind: input, shape index: {}, may-alias: {0,1}]
  %s1 = inlined_call_operand.hbm [shape: f32[8,256], index: 1, kind: output, shape index: {}, may-alias: {0,1}]
  %s2 = sld [smem:[#allocation0]]
  $region18: #{tpu_custom_call.1} parent=0
    _
  %s4 = ssub.s32 1, %s2
  %s5 = scalar_select 0, %s4, %s2
  $region1: #{tpu_custom_call.1} parent=0
    #allocation2 [shape = 'u8[8192]{0}', space=vmem, size = 0x2000, scoped, tag = 'input window, operand 0, single buffered']
    #allocation3 [shape = 's32[1]{0}', space=sflag, size = 0x4, scoped, tag = 'scoped memory for tpu_custom_call.1']
    #allocation4 [shape = 's32[1]{0}', space=sflag, size = 0x4, scoped, tag = 'scoped memory for tpu_custom_call.1']
    #allocation5 [shape = 'u8[8192]{0}', space=vmem, size = 0x2000, scoped, tag = 'output window, operand 0, single buffered']
    %6 = vsyncpa [#allocation3], 0
    %7 = vsyncpa [#allocation4], 0
    // Predicated region
    $region2: #{tpu_custom_call.1} parent=1 // pred_check
      _
    $region3: #{tpu_custom_call.1} parent=1 // pred_check_branch
      %9 = sbr.rel (0) target = $region5
    $region4: #{tpu_custom_call.1} parent=1 // pred_region
      %s11 = ssub.s32 256, 256
      %12 = vsyncadd [#allocation3], %s11
      %s14 = sshll.u32 [#allocation2], 4
      %s15 = int_to_ptr.vmem [resolvable:$true] %s14
      %17 = dma.hbm_to_vmem [thread:$0]  %s0, 256, %s15, [#allocation3]
    $region5: #{tpu_custom_call.1} parent=1 // pred_fallthru
      _
    // Predicated region
    $region6: #{tpu_custom_call.1} parent=1 // pred_check
      _
    $region7: #{tpu_custom_call.1} parent=1 // pred_check_branch
      %19 = sbr.rel (0) target = $region9
    $region8: #{tpu_custom_call.1} parent=1 // pred_region
      %20 = dma.done [#allocation3], 256
    $region9: #{tpu_custom_call.1} parent=1 // pred_fallthru
      _
    %v21 = vld [vmem:[#allocation2] sm:$0xff]
    %v22 = vld [vmem:[#allocation2 + $0x8] sm:$0xff]
    %23 = vst [vmem:[#allocation5] sm:$0xff] %v21
    %24 = vst [vmem:[#allocation5 + $0x8] sm:$0xff] %v22
    // Predicated region
    $region10: #{tpu_custom_call.1} parent=1 // pred_check
      _
    $region11: #{tpu_custom_call.1} parent=1 // pred_check_branch
      %26 = sbr.rel (0) target = $region13
    $region12: #{tpu_custom_call.1} parent=1 // pred_region
      %s28 = ssub.s32 256, 256
      %29 = vsyncadd [#allocation4], %s28
      %s31 = sshll.u32 [#allocation5], 4
      %s32 = int_to_ptr.vmem [resolvable:$true] %s31
      %34 = dma.vmem_to_hbm [thread:$0]  %s32, 256, %s1, [#allocation4]
    $region13: #{tpu_custom_call.1} parent=1 // pred_fallthru
      _
    // Predicated region
    $region14: #{tpu_custom_call.1} parent=1 // pred_check
      _
    $region15: #{tpu_custom_call.1} parent=1 // pred_check_branch
      %36 = sbr.rel (0) target = $region17
    $region16: #{tpu_custom_call.1} parent=1 // pred_region
      %37 = dma.done [#allocation4], 256
    $region17: #{tpu_custom_call.1} parent=1 // pred_fallthru
      _
    %38 = vsyncpa [#allocation3], 1
    %39 = vsyncpa [#allocation4], 1

</llo_original>
